<compile_context>
chip_gen: v5e
topology: v5e:2x2
jax: 0.10.0
libtpu: 0.0.40
codegen_flags: <defaults>
</compile_context>

<pallas_src>
import functools
import math

import jax
import jax.numpy as jnp
from jax.experimental import pallas as pl
from jax.experimental.pallas import tpu as pltpu


def _round_up(n, m):
    return ((n + m - 1) // m) * m


# ---------------------------------------------------------------------------
# Kernel
# ---------------------------------------------------------------------------
def _make_densenet_kernel(n_layers, out_nonlinearity=None,
                          matmul_dtype=jnp.bfloat16):
    """Fused MLP kernel for a static number of Linear layers.

    Ref order: (x_ref, w0, b0, w1, b1, ..., w_{L-1}, b_{L-1}, out_ref).
    Weights arrive already cast to `matmul_dtype` (bf16 = MXU-native input);
    accumulation, bias add and tanh stay in f32.
    """

    def kernel(*refs):
        x_ref = refs[0]
        o_ref = refs[-1]
        param_refs = refs[1:-1]
        h = x_ref[...].astype(jnp.float32)
        for j in range(n_layers):
            w = param_refs[2 * j][...]          # (in_p, out_p) matmul_dtype
            b = param_refs[2 * j + 1][...]      # (1, out_p)   f32
            h = jnp.dot(h.astype(matmul_dtype), w,
                        preferred_element_type=jnp.float32) + b
            if j != n_layers - 1:
                # nonlinearity() between hidden layers (Tanh, as in the
                # composite-curing FNN config), kept in f32.
                h = jnp.tanh(h)
        if out_nonlinearity is not None:
            # NOTE: must be elementwise / per-row (padded batch rows are still
            # present here; they are sliced off in the wrapper).
            h = out_nonlinearity(h)
        o_ref[...] = h.astype(o_ref.dtype)

    return kernel


# ---------------------------------------------------------------------------
# Wrapper
# ---------------------------------------------------------------------------
def densenet_forward(x, params, *, batch_tile=2048, out_nonlinearity=None,
                     lane=128, matmul_dtype=jnp.bfloat16):
    """params: list of (W, b) with W:(in, out), b:(1, out).  Returns (B, d_out)."""
    n_layers = len(params)
    B, d_in = x.shape
    d_out = params[-1][0].shape[1]

    # ---- Pad each HIDDEN layer's output feature dim up to a multiple of 128
    # so intermediate activations are lane-dense.  The FINAL layer keeps its
    # true output width so only real columns are ever written back to HBM.
    # Padded weight rows/cols and bias cols are exactly zero and tanh(0)=0, so
    # padded columns stay zero.  Weights are cast to matmul_dtype (bf16).
    padded = []
    prev_p = d_in  # keep the input feature dim unpadded (full-array block dim)
    for j, (w, b) in enumerate(params):
        fi, fo = w.shape
        fo_p = fo if j == n_layers - 1 else _round_up(fo, lane)
        w_p = (jnp.zeros((prev_p, fo_p), matmul_dtype)
               .at[:fi, :fo].set(w.astype(matmul_dtype)))
        b_p = (jnp.zeros((1, fo_p), jnp.float32)
               .at[:, :fo].set(b.astype(jnp.float32)))
        padded.append((w_p, b_p))
        prev_p = fo_p

    # ---- Batch tile: big enough to amortize the ~0.35 us/step overhead, a
    # multiple of 8, and >= 2 grid steps whenever the (8-padded) batch allows
    # it so both v7x TensorCores get work under dimension_semantics=parallel.
    B8 = _round_up(B, 8)
    tile = min(batch_tile, B8)
    if B8 >= 16:
        tile = min(tile, _round_up(pl.cdiv(B8, 2), 8))
    tile = max(8, _round_up(tile, 8))
    B_p = _round_up(B, tile)
    if B_p != B:
        x_p = jnp.zeros((B_p, d_in), x.dtype).at[:B, :].set(x)
    else:
        x_p = x

    kernel = _make_densenet_kernel(n_layers, out_nonlinearity, matmul_dtype)

    # BlockSpecs: tile x / out over the batch; params are single full blocks
    # resident in VMEM (total parameter footprint is tiny).
    in_specs = [pl.BlockSpec((tile, d_in), lambda i: (i, 0))]
    flat_params = []
    for (w, b) in padded:
        in_specs.append(pl.BlockSpec(w.shape, lambda i: (0, 0)))
        in_specs.append(pl.BlockSpec(b.shape, lambda i: (0, 0)))
        flat_params.extend([w, b])
    out_spec = pl.BlockSpec((tile, d_out), lambda i: (i, 0))

    grid_spec = pltpu.PrefetchScalarGridSpec(
        num_scalar_prefetch=0,
        grid=(B_p // tile,),
        in_specs=in_specs,
        out_specs=out_spec,
    )

    # Advisory cost estimate (flops over padded shapes, bytes without the
    # fake padded output columns).
    flops = 2 * B_p * sum(w.shape[0] * w.shape[1] for w, _ in padded)
    transcendentals = B_p * sum(w.shape[1] for w, _ in padded[:-1])
    bytes_accessed = (
        x_p.size * x_p.dtype.itemsize
        + sum(w.size * w.dtype.itemsize + b.size * b.dtype.itemsize
              for w, b in padded)
        + B_p * d_out * jnp.dtype(x.dtype).itemsize)

    out_p = pl.pallas_call(
        kernel,
        out_shape=jax.ShapeDtypeStruct((B_p, d_out), x.dtype),
        grid_spec=grid_spec,
        compiler_params=pltpu.CompilerParams(
            dimension_semantics=("parallel",),
            vmem_limit_bytes=32 * 1024 * 1024,
        ),
        cost_estimate=pl.CostEstimate(
            flops=int(flops),
            transcendentals=int(transcendentals),
            bytes_accessed=int(bytes_accessed),
        ),
    )(x_p, *flat_params)

    # Slice padded batch rows back off (output columns are already exact).
    return out_p[:B, :]


# ---------------------------------------------------------------------------
# Deterministic parameter init (matches PyTorch nn.Linear default ranges)
# ---------------------------------------------------------------------------
def init_densenet_params(key, layers):
    params = []
    for j in range(len(layers) - 1):
        fan_in, fan_out = layers[j], layers[j + 1]
        key, kw, kb = jax.random.split(key, 3)
        bound = 1.0 / math.sqrt(fan_in)
        # stored transposed: (in, out)
        w = jax.random.uniform(kw, (fan_in, fan_out), jnp.float32, -bound, bound)
        b = jax.random.uniform(kb, (1, fan_out), jnp.float32, -bound, bound)
        params.append((w, b))
    return params


# Pure-JAX f32 reference for correctness checking.
def densenet_reference(x, params, out_nonlinearity=None):
    h = x
    n = len(params)
    for j, (w, b) in enumerate(params):
        h = h @ w + b
        if j != n - 1:
            h = jnp.tanh(h)
    if out_nonlinearity is not None:
        h = out_nonlinearity(h)
    return h


# TODO(synk): BatchNorm1d (normalize=True) branch not implemented -- this
# reproduces the normalize=False configuration of DenseNet.

if __name__ == "__main__":
    # DenseNet(layers=[4, 32, 32, 2], nonlinearity=nn.Tanh, normalize=False)
    layers = [4, 32, 32, 2]

    key = jax.random.PRNGKey(0)
    key, kx1, kx2 = jax.random.split(key, 3)
    params = init_densenet_params(key, layers)

    # Case 1: tiny batch (16 rows) -> tile=8, 2-step grid, bf16 matmul path.
    x1 = jax.random.normal(kx1, (16, layers[0]), jnp.float32)
    fwd1 = jax.jit(densenet_forward)
    y1 = fwd1(x1, params)
    jax.block_until_ready(y1)
    y1_ref = densenet_reference(x1, params)
    assert y1.shape == (16, layers[-1])
    assert jnp.allclose(y1, y1_ref, atol=5e-2, rtol=5e-2), "mismatch (case 1)"

    # Case 2: batch not a multiple of the tile -> padding + 3-step grid.
    x2 = jax.random.normal(kx2, (300, layers[0]), jnp.float32)
    fwd2 = jax.jit(functools.partial(densenet_forward, batch_tile=128))
    y2 = fwd2(x2, params)
    jax.block_until_ready(y2)
    y2_ref = densenet_reference(x2, params)
    assert y2.shape == (300, layers[-1])
    assert jnp.allclose(y2, y2_ref, atol=5e-2, rtol=5e-2), "mismatch (case 2)"

    # Case 3: f32 matmul path -> tight agreement with the f32 reference
    # (validates kernel structure independently of bf16 rounding).
    fwd3 = jax.jit(functools.partial(densenet_forward, matmul_dtype=jnp.float32))
    y3 = fwd3(x1, params)
    jax.block_until_ready(y3)
    assert jnp.allclose(y3, y1_ref, atol=1e-5, rtol=1e-5), "mismatch (case 3)"

    print("KERNEL_OK")
</pallas_src>

<mosaic_0001>
module attributes {stable_mosaic.version = 11 : i64} {
  func.func @kernel(%arg0: i32, %arg1: memref<8x4xf32, #tpu.memory_space<vmem>>, %arg2: memref<4x128xbf16, #tpu.memory_space<vmem>>, %arg3: memref<1x128xf32, #tpu.memory_space<vmem>>, %arg4: memref<128x128xbf16, #tpu.memory_space<vmem>>, %arg5: memref<1x128xf32, #tpu.memory_space<vmem>>, %arg6: memref<128x2xbf16, #tpu.memory_space<vmem>>, %arg7: memref<1x2xf32, #tpu.memory_space<vmem>>, %arg8: memref<8x2xf32, #tpu.memory_space<vmem>>) attributes {dimension_semantics = [#tpu.dimension_semantics<parallel>], iteration_bounds = array<i64: 2>, scalar_prefetch = 0 : i64, scratch_operands = 0 : i64, tpu.core_type = #tpu.core_type<tc>, window_params = [{transform_indices = @transform_0, window_bounds = array<i64: 8, 4>}, {pipeline_mode = #tpu.pipeline_mode<synchronous>, transform_indices = @transform_1, window_bounds = array<i64: 4, 128>}, {pipeline_mode = #tpu.pipeline_mode<synchronous>, transform_indices = @transform_2, window_bounds = array<i64: 1, 128>}, {pipeline_mode = #tpu.pipeline_mode<synchronous>, transform_indices = @transform_3, window_bounds = array<i64: 128, 128>}, {pipeline_mode = #tpu.pipeline_mode<synchronous>, transform_indices = @transform_4, window_bounds = array<i64: 1, 128>}, {pipeline_mode = #tpu.pipeline_mode<synchronous>, transform_indices = @transform_5, window_bounds = array<i64: 128, 2>}, {pipeline_mode = #tpu.pipeline_mode<synchronous>, transform_indices = @transform_6, window_bounds = array<i64: 1, 2>}, {transform_indices = @transform_7, window_bounds = array<i64: 8, 2>}]} {
    %c0 = arith.constant 0 : index
    %c0_0 = arith.constant 0 : index
    %0 = vector.load %arg1[%c0, %c0_0] : memref<8x4xf32, #tpu.memory_space<vmem>>, vector<8x4xf32>
    %c0_1 = arith.constant 0 : index
    %c0_2 = arith.constant 0 : index
    %1 = vector.load %arg2[%c0_1, %c0_2] : memref<4x128xbf16, #tpu.memory_space<vmem>>, vector<4x128xbf16>
    %c0_3 = arith.constant 0 : index
    %c0_4 = arith.constant 0 : index
    %2 = vector.load %arg3[%c0_3, %c0_4] : memref<1x128xf32, #tpu.memory_space<vmem>>, vector<1x128xf32>
    %3 = arith.truncf %0 : vector<8x4xf32> to vector<8x4xbf16>
    %cst = arith.constant dense<0.000000e+00> : vector<8x128xf32>
    %4 = tpu.matmul %3, %1, %cst {dimension_numbers = #tpu.dot_dimension_numbers<[1], [0], [0], [1], [0, 0, 1, 1], [], []>} : vector<8x4xbf16>, vector<4x128xbf16>, vector<8x128xf32> -> vector<8x128xf32>
    %5 = vector.broadcast %2 : vector<1x128xf32> to vector<8x128xf32>
    %6 = arith.addf %4, %5 : vector<8x128xf32>
    %7 = math.tanh %6 : vector<8x128xf32>
    %c0_5 = arith.constant 0 : index
    %c0_6 = arith.constant 0 : index
    %8 = vector.load %arg4[%c0_5, %c0_6] : memref<128x128xbf16, #tpu.memory_space<vmem>>, vector<128x128xbf16>
    %c0_7 = arith.constant 0 : index
    %c0_8 = arith.constant 0 : index
    %9 = vector.load %arg5[%c0_7, %c0_8] : memref<1x128xf32, #tpu.memory_space<vmem>>, vector<1x128xf32>
    %10 = arith.truncf %7 : vector<8x128xf32> to vector<8x128xbf16>
    %cst_9 = arith.constant dense<0.000000e+00> : vector<8x128xf32>
    %11 = tpu.matmul %10, %8, %cst_9 {dimension_numbers = #tpu.dot_dimension_numbers<[1], [0], [0], [1], [0, 0, 1, 1], [], []>} : vector<8x128xbf16>, vector<128x128xbf16>, vector<8x128xf32> -> vector<8x128xf32>
    %12 = vector.broadcast %9 : vector<1x128xf32> to vector<8x128xf32>
    %13 = arith.addf %11, %12 : vector<8x128xf32>
    %14 = math.tanh %13 : vector<8x128xf32>
    %c0_10 = arith.constant 0 : index
    %c0_11 = arith.constant 0 : index
    %15 = vector.load %arg6[%c0_10, %c0_11] : memref<128x2xbf16, #tpu.memory_space<vmem>>, vector<128x2xbf16>
    %c0_12 = arith.constant 0 : index
    %c0_13 = arith.constant 0 : index
    %16 = vector.load %arg7[%c0_12, %c0_13] : memref<1x2xf32, #tpu.memory_space<vmem>>, vector<1x2xf32>
    %17 = arith.truncf %14 : vector<8x128xf32> to vector<8x128xbf16>
    %cst_14 = arith.constant dense<0.000000e+00> : vector<8x2xf32>
    %18 = tpu.matmul %17, %15, %cst_14 {dimension_numbers = #tpu.dot_dimension_numbers<[1], [0], [0], [1], [0, 0, 1, 1], [], []>} : vector<8x128xbf16>, vector<128x2xbf16>, vector<8x2xf32> -> vector<8x2xf32>
    %19 = vector.broadcast %16 : vector<1x2xf32> to vector<8x2xf32>
    %20 = arith.addf %18, %19 : vector<8x2xf32>
    %c0_15 = arith.constant 0 : index
    %c0_16 = arith.constant 0 : index
    %21 = vector.load %arg8[%c0_15, %c0_16] : memref<8x2xf32, #tpu.memory_space<vmem>>, vector<8x2xf32>
    tpu.vector_store %arg8[%c0_15, %c0_16], %20 {strides = array<i32>} : memref<8x2xf32, #tpu.memory_space<vmem>>, vector<8x2xf32>,
    return
  }
  func.func @transform_0(%arg0: i32) -> (i32, i32) {
    %c0_i32 = arith.constant 0 : i32
    %c0_i32_0 = arith.constant 0 : i32
    return %arg0, %c0_i32 : i32, i32
  }
  func.func @transform_1(%arg0: i32) -> (i32, i32) {
    %c0_i32 = arith.constant 0 : i32
    %c0_i32_0 = arith.constant 0 : i32
    %c0_i32_1 = arith.constant 0 : i32
    return %c0_i32, %c0_i32_0 : i32, i32
  }
  func.func @transform_2(%arg0: i32) -> (i32, i32) {
    %c0_i32 = arith.constant 0 : i32
    %c0_i32_0 = arith.constant 0 : i32
    %c0_i32_1 = arith.constant 0 : i32
    return %c0_i32, %c0_i32_0 : i32, i32
  }
  func.func @transform_3(%arg0: i32) -> (i32, i32) {
    %c0_i32 = arith.constant 0 : i32
    %c0_i32_0 = arith.constant 0 : i32
    %c0_i32_1 = arith.constant 0 : i32
    return %c0_i32, %c0_i32_0 : i32, i32
  }
  func.func @transform_4(%arg0: i32) -> (i32, i32) {
    %c0_i32 = arith.constant 0 : i32
    %c0_i32_0 = arith.constant 0 : i32
    %c0_i32_1 = arith.constant 0 : i32
    return %c0_i32, %c0_i32_0 : i32, i32
  }
  func.func @transform_5(%arg0: i32) -> (i32, i32) {
    %c0_i32 = arith.constant 0 : i32
    %c0_i32_0 = arith.constant 0 : i32
    %c0_i32_1 = arith.constant 0 : i32
    return %c0_i32, %c0_i32_0 : i32, i32
  }
  func.func @transform_6(%arg0: i32) -> (i32, i32) {
    %c0_i32 = arith.constant 0 : i32
    %c0_i32_0 = arith.constant 0 : i32
    %c0_i32_1 = arith.constant 0 : i32
    return %c0_i32, %c0_i32_0 : i32, i32
  }
  func.func @transform_7(%arg0: i32) -> (i32, i32) {
    %c0_i32 = arith.constant 0 : i32
    %c0_i32_0 = arith.constant 0 : i32
    return %arg0, %c0_i32 : i32, i32
  }
}

</mosaic_0001>

<llo_original>
// kernel: densenet_forward.1
$region0: #{densenet_forward.1}
  #allocation0 [shape = 'u32[]', space=smem, size = 0x4, offset = 0x4, fixed_abs, tag = 'smem constant byte address 0x4 - core index']
  #allocation1 [shape = 'u32[72,128]{1,0:T(1,128)}', space=vmem, size = 0x9000, scoped, tag = 'internal scratch']
  %s0 = inlined_call_operand.vmem [shape: f32[16,4], index: 0, kind: input, shape index: {}]
  %s1 = inlined_call_operand.vmem [shape: bf16[4,128], index: 1, kind: input, shape index: {}]
  %s2 = inlined_call_operand.vmem [shape: f32[1,128], index: 2, kind: input, shape index: {}]
  %s3 = inlined_call_operand.vmem [shape: bf16[128,128], index: 3, kind: input, shape index: {}]
  %s4 = inlined_call_operand.vmem [shape: f32[1,128], index: 4, kind: input, shape index: {}]
  %s5 = inlined_call_operand.vmem [shape: bf16[128,2], index: 5, kind: input, shape index: {}]
  %s6 = inlined_call_operand.vmem [shape: f32[1,2], index: 6, kind: input, shape index: {}]
  %s7 = inlined_call_operand.vmem [shape: f32[16,2], index: 7, kind: output, shape index: {}]
  %s8 = sld [smem:[#allocation0]]
  $region61: #{densenet_forward.1} parent=0
    _
  %s10 = ssub.s32 1, %s8
  %s11 = scalar_select 0, %s10, %s8
  loop: start=0, step=1, limit=4
  $region2: #{densenet_forward.1} parent=0 // loop_pre_header
    _
  $region3: #{densenet_forward.1} parent=0 // loop_header
    %s13 = sphi 0, %s17
    %p14 = scmp.ge.s32.totalorder %s13, 4
    %s23 = sphi 0, %s25
    %s26 = sphi 0, %s23
    %s27 = sphi 0, %s26
    %s43 = sphi 0, %s27
    %s47 = sphi 0, %s47
    %s49 = sphi 0, %s47
    %s50 = sphi 0, %s49
    %s64 = sphi 0, %s50
    %s68 = sphi 0, %s68
    %s70 = sphi 0, %s68
    %s71 = sphi 0, %s70
    %s85 = sphi 0, %s71
    %s89 = sphi 0, %s89
    %s91 = sphi 0, %s89
    %s92 = sphi 0, %s91
    %s106 = sphi 0, %s92
    %s110 = sphi 0, %s110
    %s112 = sphi 0, %s110
    %s113 = sphi 0, %s112
    %s127 = sphi 0, %s113
    %s131 = sphi 0, %s131
    %s133 = sphi 0, %s131
    %s134 = sphi 0, %s133
    %s148 = sphi 0, %s134
    %s152 = sphi 0, %s152
    %s154 = sphi 0, %s152
    %s155 = sphi 0, %s154
    %s169 = sphi 0, %s155
    %s175 = sphi 0, %s177
    %s178 = sphi 0, %s175
    %s179 = sphi 0, %s178
    %s195 = sphi 0, %s179
  $region4: #{densenet_forward.1} parent=0 // loop_header_branch
    %16 = sbr.rel (%p14) target = $region8
  $region5: #{densenet_forward.1} parent=0 // loop_body
    %s18 = ssub.s32 %s13, 1
    %s19 = ssub.s32 %s13, 2
    %s20 = sadd.s32 %s13, 1
    %s21 = ssub.s32 %s13, %s20
    %p22 = scmp.eq.s32.totalorder %s21, 0
    %s24 = sadd.s32 %s23, 1
    %s25 = scalar_select %p22, %s23, %s24
    %p28 = pneg %p22
    %p29 = scmp.eq.s32.totalorder %s13, 1
    %p30 = por %p28, %p29
    %p31 = scmp.ne.s32.totalorder %s23, %s26
    %p32 = scmp.eq.s32.totalorder %s13, 0
    %p33 = por %p31, %p32
    %p34 = scmp.ne.s32.totalorder %s23, %s26
    %p35 = scmp.eq.s32.totalorder %s18, 1
    %p36 = por %p34, %p35
    %p37 = scmp.ne.s32.totalorder %s26, %s27
    %p38 = scmp.eq.s32.totalorder %s18, 0
    %p39 = por %p37, %p38
    %p40 = scmp.ne.s32.totalorder %s26, %s27
    %p41 = scmp.eq.s32.totalorder %s19, 1
    %p42 = por %p40, %p41
    %p44 = scmp.ne.s32.totalorder %s27, %s43
    %p45 = scmp.eq.s32.totalorder %s19, 0
    %p46 = por %p44, %p45
    %s48 = sadd.s32 %s47, 1
    %p51 = scmp.eq.s32.totalorder %s13, 1
    %p52 = scmp.ne.s32.totalorder %s47, %s49
    %p53 = scmp.eq.s32.totalorder %s13, 0
    %p54 = por %p52, %p53
    %p55 = scmp.ne.s32.totalorder %s47, %s49
    %p56 = scmp.eq.s32.totalorder %s18, 1
    %p57 = por %p55, %p56
    %p58 = scmp.ne.s32.totalorder %s49, %s50
    %p59 = scmp.eq.s32.totalorder %s18, 0
    %p60 = por %p58, %p59
    %p61 = scmp.ne.s32.totalorder %s49, %s50
    %p62 = scmp.eq.s32.totalorder %s19, 1
    %p63 = por %p61, %p62
    %p65 = scmp.ne.s32.totalorder %s50, %s64
    %p66 = scmp.eq.s32.totalorder %s19, 0
    %p67 = por %p65, %p66
    %s69 = sadd.s32 %s68, 1
    %p72 = scmp.eq.s32.totalorder %s13, 1
    %p73 = scmp.ne.s32.totalorder %s68, %s70
    %p74 = scmp.eq.s32.totalorder %s13, 0
    %p75 = por %p73, %p74
    %p76 = scmp.ne.s32.totalorder %s68, %s70
    %p77 = scmp.eq.s32.totalorder %s18, 1
    %p78 = por %p76, %p77
    %p79 = scmp.ne.s32.totalorder %s70, %s71
    %p80 = scmp.eq.s32.totalorder %s18, 0
    %p81 = por %p79, %p80
    %p82 = scmp.ne.s32.totalorder %s70, %s71
    %p83 = scmp.eq.s32.totalorder %s19, 1
    %p84 = por %p82, %p83
    %p86 = scmp.ne.s32.totalorder %s71, %s85
    %p87 = scmp.eq.s32.totalorder %s19, 0
    %p88 = por %p86, %p87
    %s90 = sadd.s32 %s89, 1
    %p93 = scmp.eq.s32.totalorder %s13, 1
    %p94 = scmp.ne.s32.totalorder %s89, %s91
    %p95 = scmp.eq.s32.totalorder %s13, 0
    %p96 = por %p94, %p95
    %p97 = scmp.ne.s32.totalorder %s89, %s91
    %p98 = scmp.eq.s32.totalorder %s18, 1
    %p99 = por %p97, %p98
    %p100 = scmp.ne.s32.totalorder %s91, %s92
    %p101 = scmp.eq.s32.totalorder %s18, 0
    %p102 = por %p100, %p101
    %p103 = scmp.ne.s32.totalorder %s91, %s92
    %p104 = scmp.eq.s32.totalorder %s19, 1
    %p105 = por %p103, %p104
    %p107 = scmp.ne.s32.totalorder %s92, %s106
    %p108 = scmp.eq.s32.totalorder %s19, 0
    %p109 = por %p107, %p108
    %s111 = sadd.s32 %s110, 1
    %p114 = scmp.eq.s32.totalorder %s13, 1
    %p115 = scmp.ne.s32.totalorder %s110, %s112
    %p116 = scmp.eq.s32.totalorder %s13, 0
    %p117 = por %p115, %p116
    %p118 = scmp.ne.s32.totalorder %s110, %s112
    %p119 = scmp.eq.s32.totalorder %s18, 1
    %p120 = por %p118, %p119
    %p121 = scmp.ne.s32.totalorder %s112, %s113
    %p122 = scmp.eq.s32.totalorder %s18, 0
    %p123 = por %p121, %p122
    %p124 = scmp.ne.s32.totalorder %s112, %s113
    %p125 = scmp.eq.s32.totalorder %s19, 1
    %p126 = por %p124, %p125
    %p128 = scmp.ne.s32.totalorder %s113, %s127
    %p129 = scmp.eq.s32.totalorder %s19, 0
    %p130 = por %p128, %p129
    %s132 = sadd.s32 %s131, 1
    %p135 = scmp.eq.s32.totalorder %s13, 1
    %p136 = scmp.ne.s32.totalorder %s131, %s133
    %p137 = scmp.eq.s32.totalorder %s13, 0
    %p138 = por %p136, %p137
    %p139 = scmp.ne.s32.totalorder %s131, %s133
    %p140 = scmp.eq.s32.totalorder %s18, 1
    %p141 = por %p139, %p140
    %p142 = scmp.ne.s32.totalorder %s133, %s134
    %p143 = scmp.eq.s32.totalorder %s18, 0
    %p144 = por %p142, %p143
    %p145 = scmp.ne.s32.totalorder %s133, %s134
    %p146 = scmp.eq.s32.totalorder %s19, 1
    %p147 = por %p145, %p146
    %p149 = scmp.ne.s32.totalorder %s134, %s148
    %p150 = scmp.eq.s32.totalorder %s19, 0
    %p151 = por %p149, %p150
    %s153 = sadd.s32 %s152, 1
    %p156 = scmp.eq.s32.totalorder %s13, 1
    %p157 = scmp.ne.s32.totalorder %s152, %s154
    %p158 = scmp.eq.s32.totalorder %s13, 0
    %p159 = por %p157, %p158
    %p160 = scmp.ne.s32.totalorder %s152, %s154
    %p161 = scmp.eq.s32.totalorder %s18, 1
    %p162 = por %p160, %p161
    %p163 = scmp.ne.s32.totalorder %s154, %s155
    %p164 = scmp.eq.s32.totalorder %s18, 0
    %p165 = por %p163, %p164
    %p166 = scmp.ne.s32.totalorder %s154, %s155
    %p167 = scmp.eq.s32.totalorder %s19, 1
    %p168 = por %p166, %p167
    %p170 = scmp.ne.s32.totalorder %s155, %s169
    %p171 = scmp.eq.s32.totalorder %s19, 0
    %p172 = por %p170, %p171
    %s173 = ssub.s32 %s13, %s20
    %p174 = scmp.eq.s32.totalorder %s173, 0
    %s176 = sadd.s32 %s175, 1
    %s177 = scalar_select %p174, %s175, %s176
    %p180 = pneg %p174
    %p181 = scmp.eq.s32.totalorder %s13, 1
    %p182 = por %p180, %p181
    %p183 = scmp.ne.s32.totalorder %s175, %s178
    %p184 = scmp.eq.s32.totalorder %s13, 0
    %p185 = por %p183, %p184
    %p186 = scmp.ne.s32.totalorder %s175, %s178
    %p187 = scmp.eq.s32.totalorder %s18, 1
    %p188 = por %p186, %p187
    %p189 = scmp.ne.s32.totalorder %s178, %s179
    %p190 = scmp.eq.s32.totalorder %s18, 0
    %p191 = por %p189, %p190
    %p192 = scmp.ne.s32.totalorder %s178, %s179
    %p193 = scmp.eq.s32.totalorder %s19, 1
    %p194 = por %p192, %p193
    %p196 = scmp.ne.s32.totalorder %s179, %s195
    %p197 = scmp.eq.s32.totalorder %s19, 0
    %p198 = por %p196, %p197
    %p199 = scmp.le.s32.totalorder 1, %s13
    %p200 = scmp.lt.s32.totalorder %s13, 3
    %p201 = pnand %p199, %p200
    %p202 = pneg %p201
    // Predicated region
    $region9: #{densenet_forward.1} parent=5 // pred_check
      _
    $region10: #{densenet_forward.1} parent=5 // pred_check_branch
      %204 = sbr.rel (%p201) target = $region12
    $region11: #{densenet_forward.1} parent=5 // pred_region
      %s205 = ssub.s32 %s13, 1
      // Predicated region
      $region13: #{densenet_forward.1} parent=11 // pred_check
        %p206 = pneg %p60
      $region14: #{densenet_forward.1} parent=11 // pred_check_branch
        %208 = sbr.rel (%p206) target = $region16
      $region15: #{densenet_forward.1} parent=11 // pred_region
        _
      $region16: #{densenet_forward.1} parent=11 // pred_fallthru
        _
      // Predicated region
      $region17: #{densenet_forward.1} parent=11 // pred_check
        %p209 = pneg %p81
      $region18: #{densenet_forward.1} parent=11 // pred_check_branch
        %211 = sbr.rel (%p209) target = $region20
      $region19: #{densenet_forward.1} parent=11 // pred_region
        _
      $region20: #{densenet_forward.1} parent=11 // pred_fallthru
        _
      // Predicated region
      $region21: #{densenet_forward.1} parent=11 // pred_check
        %p212 = pneg %p102
      $region22: #{densenet_forward.1} parent=11 // pred_check_branch
        %214 = sbr.rel (%p212) target = $region24
      $region23: #{densenet_forward.1} parent=11 // pred_region
        _
      $region24: #{densenet_forward.1} parent=11 // pred_fallthru
        _
      // Predicated region
      $region25: #{densenet_forward.1} parent=11 // pred_check
        %p215 = pneg %p123
      $region26: #{densenet_forward.1} parent=11 // pred_check_branch
        %217 = sbr.rel (%p215) target = $region28
      $region27: #{densenet_forward.1} parent=11 // pred_region
        _
      $region28: #{densenet_forward.1} parent=11 // pred_fallthru
        _
      // Predicated region
      $region29: #{densenet_forward.1} parent=11 // pred_check
        %p218 = pneg %p144
      $region30: #{densenet_forward.1} parent=11 // pred_check_branch
        %220 = sbr.rel (%p218) target = $region32
      $region31: #{densenet_forward.1} parent=11 // pred_region
        _
      $region32: #{densenet_forward.1} parent=11 // pred_fallthru
        _
      // Predicated region
      $region33: #{densenet_forward.1} parent=11 // pred_check
        %p221 = pneg %p165
      $region34: #{densenet_forward.1} parent=11 // pred_check_branch
        %223 = sbr.rel (%p221) target = $region36
      $region35: #{densenet_forward.1} parent=11 // pred_region
        _
      $region36: #{densenet_forward.1} parent=11 // pred_fallthru
        _
    $region12: #{densenet_forward.1} parent=5 // pred_fallthru
      _
    %p224 = scmp.lt.s32.totalorder %s13, 2
    // Predicated region
    $region37: #{densenet_forward.1} parent=5 // pred_check
      %p225 = pneg %p224
    $region38: #{densenet_forward.1} parent=5 // pred_check_branch
      %227 = sbr.rel (%p225) target = $region40
    $region39: #{densenet_forward.1} parent=5 // pred_region
      // Predicated region
      $region41: #{densenet_forward.1} parent=39 // pred_check
        %p228 = pneg %p33
      $region42: #{densenet_forward.1} parent=39 // pred_check_branch
        %230 = sbr.rel (%p228) target = $region44
      $region43: #{densenet_forward.1} parent=39 // pred_region
        %p231 = scmp.lt.s32.totalorder %s13, 1
        %s232 = scalar_select %p231, %s13, 1
        %s233 = smul.addr %s232, 8
        %s234 = scalar_lea.vmem %s0, %s233
      $region44: #{densenet_forward.1} parent=39 // pred_fallthru
        _
    $region40: #{densenet_forward.1} parent=5 // pred_fallthru
      _
    %p235 = scmp.le.s32.totalorder 1, %s13
    %p236 = scmp.lt.s32.totalorder %s13, 3
    %p237 = pnand %p235, %p236
    %p238 = pneg %p237
    // Predicated region
    $region45: #{densenet_forward.1} parent=5 // pred_check
      _
    $region46: #{densenet_forward.1} parent=5 // pred_check_branch
      %240 = sbr.rel (%p237) target = $region48
    $region47: #{densenet_forward.1} parent=5 // pred_region
      %s241 = ssub.s32 %s13, 1
      %p242 = scmp.lt.s32.totalorder %s18, 1
      %s243 = scalar_select %p242, %s18, 1
      %s244 = smul.addr %s243, 8
      %s245 = scalar_lea.vmem %s0, %s244
      %p246 = pneg %p39
      %p247 = pneg %p36
      %p248 = pneg %p60
      %p249 = pneg %p57
      %p250 = pneg %p81
      %p251 = pneg %p78
      %p252 = pneg %p102
      %p253 = pneg %p99
      %p254 = pneg %p123
      %p255 = pneg %p120
      %p256 = pneg %p144
      %p257 = pneg %p141
      %p258 = pneg %p165
      %p259 = pneg %p162
      %p260 = pneg %p191
      %p261 = pneg %p188
      %p262 = scmp.lt.s32.totalorder %s18, 1
      %s263 = scalar_select %p262, %s18, 1
      %s264 = smul.addr %s263, 8
      %s265 = scalar_lea.vmem %s7, %s264
      %p266 = scmp.lt.s32.totalorder %s18, 1
      %s267 = scalar_select %p266, %s18, 1
      %s268 = smul.addr %s267, 8
      %s269 = scalar_lea.vmem %s0, %s268
      %p270 = scmp.lt.s32.totalorder %s18, 1
      %s271 = scalar_select %p270, %s18, 1
      %s272 = smul.addr %s271, 8
      %s273 = scalar_lea.vmem %s7, %s272
      %v275 = vld [vmem:[%s269] sm:$0xff]
      %v276 = vld [vmem:[%s1] sm:$0x3]
      %v277 = vld [vmem:[%s2] sm:$0x1]
      %v278 = vpack.c.bf16 %v275, %v275
      %v280 = vperm.slane %v277, 0
      %vm282 = vcmask 31744
      %v284 = vsel %vm282, %v278, 0
      %vm286 = vcmask 1041408
      %v288 = vsel %vm286, %v276, 0
      %290 = vmatpush.bf16.msra.mxu0 0
      %291 = vmatpush.bf16.msra.mxu0 0
      %292 = vmatpush.bf16.msra.mxu0 0
      %293 = vmatpush.bf16.msra.mxu0 0
      %294 = vmatpush.bf16.msra.mxu0 0
      %295 = vmatpush.bf16.msra.mxu0 0
      %296 = vmatpush.bf16.msra.mxu0 0
      %297 = vmatpush.bf16.msra.mxu0 %v288
      %298 = vmatmul.bf16.gmra.mxu0 %v284
      %v299 = vpop.f32.mrf.mxu0
      %v300 = vadd.f32 %v280, %v299
      %v301 = vpop.f32.mrf.mxu0
      %302 = vdwg.mxu0
      %v303 = vtanh.pop %v300
      %v304 = vld [vmem:[%s3] sm:$0xf]
      %v305 = vld [vmem:[%s3 + $0x4] sm:$0xf]
      %v306 = vld [vmem:[%s3 + $0x8] sm:$0xf]
      %v307 = vld [vmem:[%s3 + $0xc] sm:$0xf]
      %v308 = vld [vmem:[%s3 + $0x10] sm:$0xf]
      %v309 = vld [vmem:[%s3 + $0x14] sm:$0xf]
      %v310 = vld [vmem:[%s3 + $0x18] sm:$0xf]
      %v311 = vld [vmem:[%s3 + $0x1c] sm:$0xf]
      %v312 = vld [vmem:[%s3 + $0x20] sm:$0xf]
      %v313 = vld [vmem:[%s3 + $0x24] sm:$0xf]
      %v314 = vld [vmem:[%s3 + $0x28] sm:$0xf]
      %v315 = vld [vmem:[%s3 + $0x2c] sm:$0xf]
      %v316 = vld [vmem:[%s3 + $0x30] sm:$0xf]
      %v317 = vld [vmem:[%s3 + $0x34] sm:$0xf]
      %v318 = vld [vmem:[%s3 + $0x38] sm:$0xf]
      %v319 = vld [vmem:[%s3 + $0x3c] sm:$0xf]
      %v320 = vld [vmem:[%s4] sm:$0x1]
      %v321 = vpack.c.bf16 %v303, %v303
      %v323 = vperm.slane %v320, 0
      %v341 = vunpack.c.l.b16 %v304
      %v342 = vunpack.c.l.b16 %v305
      %v343 = vunpack.c.l.b16 %v306
      %v344 = vunpack.c.l.b16 %v307
      %v345 = vunpack.c.l.b16 %v308
      %v346 = vunpack.c.l.b16 %v309
      %v347 = vunpack.c.l.b16 %v310
      %v348 = vunpack.c.l.b16 %v311
      %v349 = vunpack.c.l.b16 %v312
      %v350 = vunpack.c.l.b16 %v313
      %v351 = vunpack.c.l.b16 %v314
      %v352 = vunpack.c.l.b16 %v315
      %v353 = vunpack.c.l.b16 %v316
      %v354 = vunpack.c.l.b16 %v317
      %v355 = vunpack.c.l.b16 %v318
      %v356 = vunpack.c.l.b16 %v319
      %v357 = vpack.c.b16 %v342, %v341
      %v358 = vpack.c.b16 %v344, %v343
      %v359 = vpack.c.b16 %v346, %v345
      %v360 = vpack.c.b16 %v348, %v347
      %v361 = vpack.c.b16 %v350, %v349
      %v362 = vpack.c.b16 %v352, %v351
      %v363 = vpack.c.b16 %v354, %v353
      %v364 = vpack.c.b16 %v356, %v355
      %373 = vmatpush.bf16.msra.mxu0 %v364
      %374 = vmatpush.bf16.msra.mxu0 %v363
      %375 = vmatpush.bf16.msra.mxu0 %v362
      %376 = vmatpush.bf16.msra.mxu0 %v361
      %377 = vmatpush.bf16.msra.mxu0 %v360
      %378 = vmatpush.bf16.msra.mxu0 %v359
      %379 = vmatpush.bf16.msra.mxu0 %v358
      %380 = vmatpush.bf16.msra.mxu0 %v357
      %381 = vmatmul.bf16.gmra.mxu0 %v321
      %v382 = vpop.f32.mrf.mxu0
      %v383 = vadd.f32 %v323, %v382
      %v384 = vpop.f32.mrf.mxu0
      %385 = vdwg.mxu0
      %v386 = vtanh.pop %v383
      %v387 = vld [vmem:[%s5] sm:$0xf]
      %v388 = vld [vmem:[%s5 + $0x4] sm:$0xf]
      %v389 = vld [vmem:[%s5 + $0x8] sm:$0xf]
      %v390 = vld [vmem:[%s5 + $0xc] sm:$0xf]
      %v391 = vld [vmem:[%s5 + $0x10] sm:$0xf]
      %v392 = vld [vmem:[%s5 + $0x14] sm:$0xf]
      %v393 = vld [vmem:[%s5 + $0x18] sm:$0xf]
      %v394 = vld [vmem:[%s5 + $0x1c] sm:$0xf]
      %v395 = vld [vmem:[%s5 + $0x20] sm:$0xf]
      %v396 = vld [vmem:[%s5 + $0x24] sm:$0xf]
      %v397 = vld [vmem:[%s5 + $0x28] sm:$0xf]
      %v398 = vld [vmem:[%s5 + $0x2c] sm:$0xf]
      %v399 = vld [vmem:[%s5 + $0x30] sm:$0xf]
      %v400 = vld [vmem:[%s5 + $0x34] sm:$0xf]
      %v401 = vld [vmem:[%s5 + $0x38] sm:$0xf]
      %v402 = vld [vmem:[%s5 + $0x3c] sm:$0xf]
      %v403 = vld [vmem:[%s6] sm:$0x1]
      %v404 = vpack.c.bf16 %v386, %v386
      %v406 = vperm.slane %v403, 0
      %v424 = vunpack.c.l.b16 %v387
      %v425 = vunpack.c.l.b16 %v388
      %v426 = vunpack.c.l.b16 %v389
      %v427 = vunpack.c.l.b16 %v390
      %v428 = vunpack.c.l.b16 %v391
      %v429 = vunpack.c.l.b16 %v392
      %v430 = vunpack.c.l.b16 %v393
      %v431 = vunpack.c.l.b16 %v394
      %v432 = vunpack.c.l.b16 %v395
      %v433 = vunpack.c.l.b16 %v396
      %v434 = vunpack.c.l.b16 %v397
      %v435 = vunpack.c.l.b16 %v398
      %v436 = vunpack.c.l.b16 %v399
      %v437 = vunpack.c.l.b16 %v400
      %v438 = vunpack.c.l.b16 %v401
      %v439 = vunpack.c.l.b16 %v402
      %v440 = vpack.c.b16 %v425, %v424
      %v441 = vpack.c.b16 %v427, %v426
      %v442 = vpack.c.b16 %v429, %v428
      %v443 = vpack.c.b16 %v431, %v430
      %v444 = vpack.c.b16 %v433, %v432
      %v445 = vpack.c.b16 %v435, %v434
      %v446 = vpack.c.b16 %v437, %v436
      %v447 = vpack.c.b16 %v439, %v438
      %456 = vmatpush.bf16.msra.mxu0 %v447
      %457 = vmatpush.bf16.msra.mxu0 %v446
      %458 = vmatpush.bf16.msra.mxu0 %v445
      %459 = vmatpush.bf16.msra.mxu0 %v444
      %460 = vmatpush.bf16.msra.mxu0 %v443
      %461 = vmatpush.bf16.msra.mxu0 %v442
      %462 = vmatpush.bf16.msra.mxu0 %v441
      %463 = vmatpush.bf16.msra.mxu0 %v440
      %464 = vmatmul.bf16.gmra.mxu0 %v404
      %v465 = vpop.f32.mrf.mxu0
      %v466 = vadd.f32 %v406, %v465
      %v467 = vpop.f32.mrf.mxu0
      %468 = vdwg.mxu0
      %vm469 = vcmask 15360
      %470 = vst.msk [vmem:[%s273] sm:$0xff] %vm469, %v466
      %p471 = scmp.lt.s32.totalorder %s18, 1
      %s472 = scalar_select %p471, %s18, 1
      %s473 = smul.addr %s472, 8
      %s474 = scalar_lea.vmem %s7, %s473
      // Predicated region
      $region49: #{densenet_forward.1} parent=47 // pred_check
        %p475 = pneg %p188
      $region50: #{densenet_forward.1} parent=47 // pred_check_branch
        %477 = sbr.rel (%p475) target = $region52
      $region51: #{densenet_forward.1} parent=47 // pred_region
        _
      $region52: #{densenet_forward.1} parent=47 // pred_fallthru
        _
    $region48: #{densenet_forward.1} parent=5 // pred_fallthru
      _
    %p478 = scmp.le.s32.totalorder 2, %s13
    // Predicated region
    $region53: #{densenet_forward.1} parent=5 // pred_check
      %p479 = pneg %p478
    $region54: #{densenet_forward.1} parent=5 // pred_check_branch
      %481 = sbr.rel (%p479) target = $region56
    $region55: #{densenet_forward.1} parent=5 // pred_region
      %s482 = ssub.s32 %s13, 2
      // Predicated region
      $region57: #{densenet_forward.1} parent=55 // pred_check
        %p483 = pneg %p194
      $region58: #{densenet_forward.1} parent=55 // pred_check_branch
        %485 = sbr.rel (%p483) target = $region60
      $region59: #{densenet_forward.1} parent=55 // pred_region
        %p486 = scmp.lt.s32.totalorder %s19, 1
        %s487 = scalar_select %p486, %s19, 1
        %s488 = smul.addr %s487, 8
        %s489 = scalar_lea.vmem %s7, %s488
      $region60: #{densenet_forward.1} parent=55 // pred_fallthru
        _
    $region56: #{densenet_forward.1} parent=5 // pred_fallthru
      _
  $region6: #{densenet_forward.1} parent=0 // loop_footer
    %s17 = sadd.s32 1, %s13
  $region7: #{densenet_forward.1} parent=0 // loop_footer_branch
    %12 = sbr.rel target = $region3
  $region8: #{densenet_forward.1} parent=0 // loop_exit
    _

</llo_original>
